<compile_context>
chip_gen: v7x
topology: tpu7x:2x2x1
jax: 0.10.0
libtpu: 0.0.40
codegen_flags: <defaults>
</compile_context>

<pallas_src>
import functools

import jax
import jax.numpy as jnp
import numpy as np
from jax.experimental import pallas as pl
from jax.experimental.pallas import tpu as pltpu


def _round_up(x, m):
    return (x + m - 1) // m * m


# ----------------------------------------------------------------------------
# Fused multi-layer LSTM kernel: whole sequence + all layers in one call.
# PyTorch gate order i, f, g, o.  Zero initial (h, c).
# ----------------------------------------------------------------------------
def _lstm_stack_kernel(L, H, T, Bp, x_ref, *args):
    layer_refs = args[: 3 * L]           # (w_ih_t, w_hh_t, bias) per layer
    o_ref = args[3 * L]                  # (T*Bp, H) f32 output (VMEM-resident)
    h_sc, c_sc, xg_sc = args[3 * L + 1:]  # (Bp,H), (Bp,H), (T*Bp,4H) f32

    for l in range(L):
        w_ih = layer_refs[3 * l][...]        # (D_in, 4H) bf16
        w_hh = layer_refs[3 * l + 1][...]    # (H,    4H) bf16
        bias = layer_refs[3 * l + 2][...]    # (1,    4H) f32

        # Layer 0 reads the external input; layers >= 1 read the previous
        # layer's output (o_ref).  The full input projection is consumed into
        # xg_sc here, so overwriting o_ref inside the time loop below is safe.
        in_val = (x_ref[...] if l == 0 else o_ref[...]).astype(jnp.bfloat16)

        # One big MXU matmul per layer for the input projection; bias folded.
        xg_sc[...] = (
            jnp.dot(in_val, w_ih, preferred_element_type=jnp.float32) + bias
        )                                                     # (T*Bp, 4H) f32

        h_sc[...] = jnp.zeros_like(h_sc)
        c_sc[...] = jnp.zeros_like(c_sc)

        def step(t, carry, w_hh=w_hh):
            row = pl.multiple_of(t * Bp, Bp)      # Bp % 8 == 0 -> aligned
            h_prev = h_sc[...]                    # (Bp, H) f32
            c_prev = c_sc[...]                    # (Bp, H) f32

            gates = xg_sc[pl.ds(row, Bp), :] + jnp.dot(
                h_prev.astype(jnp.bfloat16), w_hh,
                preferred_element_type=jnp.float32)           # (Bp, 4H) f32

            i = jax.nn.sigmoid(gates[:, 0 * H:1 * H])
            f = jax.nn.sigmoid(gates[:, 1 * H:2 * H])
            g = jnp.tanh(gates[:, 2 * H:3 * H])
            o = jax.nn.sigmoid(gates[:, 3 * H:4 * H])

            c = f * c_prev + i * g
            h = o * jnp.tanh(c)

            c_sc[...] = c
            h_sc[...] = h
            o_ref[pl.ds(row, Bp), :] = h
            return carry

        jax.lax.fori_loop(0, T, step, 0)


def lstm_stack(x_2d, layer_params, H, T, Bp):
    """Run all LSTM layers over the full (padded) sequence in one pallas_call.

    x_2d:         (T*Bp, D) f32, time-major rows, batch padded to Bp (mult. 8)
    layer_params: list of (w_ih_t bf16 (D_in,4H), w_hh_t bf16 (H,4H),
                           bias f32 (1,4H))
    returns       (T*Bp, H) f32
    """
    TB, D = x_2d.shape
    L = len(layer_params)

    flat = []
    for p in layer_params:
        flat.extend(p)

    # Advisory cost estimate for XLA scheduling around the custom call.
    flops = 0
    bytes_acc = x_2d.size * 4 + TB * H * 4
    d_in = D
    for _ in range(L):
        flops += 2 * TB * (d_in + H) * 4 * H
        bytes_acc += (d_in * 4 * H + H * 4 * H) * 2 + 4 * H * 4
        d_in = H
    transcendentals = L * TB * 5 * H

    return pl.pallas_call(
        functools.partial(_lstm_stack_kernel, L, H, T, Bp),
        out_shape=jax.ShapeDtypeStruct((TB, H), jnp.float32),
        scratch_shapes=[
            pltpu.VMEM((Bp, H), jnp.float32),        # h state
            pltpu.VMEM((Bp, H), jnp.float32),        # c state
            pltpu.VMEM((TB, 4 * H), jnp.float32),    # precomputed input gates
        ],
        cost_estimate=pl.CostEstimate(
            flops=flops,
            transcendentals=transcendentals,
            bytes_accessed=bytes_acc,
        ),
    )(x_2d, *flat)


# ----------------------------------------------------------------------------
# Final Linear kernel: tiled (N, H) @ (H, V) + b, grid over rows and vocab.
# ----------------------------------------------------------------------------
def _linear_kernel(x_ref, w_ref, b_ref, o_ref):
    o_ref[...] = (
        jnp.dot(x_ref[...].astype(jnp.bfloat16), w_ref[...],
                preferred_element_type=jnp.float32)
        + b_ref[...]
    )


def linear(x, w_t, b, *, tm=256, tn=512):
    """x: (N, H) f32, w_t: (H, V) bf16 (pre-transposed), b: (1, V) f32."""
    N, H = x.shape
    V = w_t.shape[1]
    tm = N if N <= tm else tm            # small N -> single full-row block
    tn = V if V <= tn else tn            # tn stays a multiple of 128 otherwise
    grid = (pl.cdiv(N, tm), pl.cdiv(V, tn))

    flops = 2 * N * H * V
    bytes_acc = N * H * 4 + H * V * 2 + V * 4 + N * V * 4

    return pl.pallas_call(
        _linear_kernel,
        out_shape=jax.ShapeDtypeStruct((N, V), jnp.float32),
        grid=grid,
        in_specs=[
            pl.BlockSpec((tm, H), lambda i, j: (i, 0)),
            pl.BlockSpec((H, tn), lambda i, j: (0, j)),
            pl.BlockSpec((1, tn), lambda i, j: (0, j)),
        ],
        out_specs=pl.BlockSpec((tm, tn), lambda i, j: (i, j)),
        compiler_params=pltpu.CompilerParams(
            dimension_semantics=("parallel", "parallel")),
        cost_estimate=pl.CostEstimate(
            flops=flops, transcendentals=0, bytes_accessed=bytes_acc),
    )(x, w_t, b)


# ----------------------------------------------------------------------------
# DecoderRNN forward (glue in plain JAX, hot paths in Pallas)
# ----------------------------------------------------------------------------
class DecoderRNNPallas:
    def __init__(self, args, key):
        self.word_dime = args["word_dime"]
        self.hidd_dime = args["hidd_dime"]
        self.hidd_layer = args["hidd_layer"]
        self.vocab_size = args["vocab_size"]
        self.max_seq_leng = args["max_seq_leng"]

        keys = jax.random.split(key, 1 + 4 * self.hidd_layer + 2)
        k = iter(keys)

        # Embedding: (vocab_size, word_dime), ~N(0,1) like nn.Embedding default.
        self.embed_w = jax.random.normal(
            next(k), (self.vocab_size, self.word_dime), jnp.float32
        )

        # LSTM params per layer (PyTorch shapes: W_ih (4H, D_in), W_hh (4H, H)).
        # Stored pre-transposed; matmul weights in bf16, folded bias in f32.
        self.lstm_params = []
        H = self.hidd_dime
        bound = 1.0 / np.sqrt(H)
        for layer in range(self.hidd_layer):
            d_in = self.word_dime if layer == 0 else H
            w_ih = jax.random.uniform(next(k), (4 * H, d_in), jnp.float32,
                                      -bound, bound)
            w_hh = jax.random.uniform(next(k), (4 * H, H), jnp.float32,
                                      -bound, bound)
            b_ih = jax.random.uniform(next(k), (4 * H,), jnp.float32,
                                      -bound, bound)
            b_hh = jax.random.uniform(next(k), (4 * H,), jnp.float32,
                                      -bound, bound)
            self.lstm_params.append((
                w_ih.T.astype(jnp.bfloat16),            # (D_in, 4H)
                w_hh.T.astype(jnp.bfloat16),            # (H,    4H)
                (b_ih + b_hh).reshape(1, 4 * H),        # (1,    4H) f32
            ))

        # Linear: pre-transposed (H, V) bf16 weight + (1, V) f32 bias, done
        # once at init (no per-forward transpose pass).
        lbound = 1.0 / np.sqrt(H)
        lin_w = jax.random.uniform(next(k), (self.vocab_size, H),
                                   jnp.float32, -lbound, lbound)
        self.lin_w_t = lin_w.T.astype(jnp.bfloat16)      # (H, V)
        self.lin_b = jax.random.uniform(next(k), (self.vocab_size,),
                                        jnp.float32, -lbound, lbound
                                        ).reshape(1, self.vocab_size)

    def forward(self, features, caption, leng):
        """features: (B, word_dime) f32, caption: (B, T_cap) int32,
        leng: python list of ints, sorted descending (pack_padded_sequence
        enforce_sorted=True semantics). Returns (sum(leng), vocab_size)."""
        B, T_cap = caption.shape
        D, H = self.word_dime, self.hidd_dime

        # Embedding lookup + (identity) dropout.
        embed_captn = jnp.take(self.embed_w, caption, axis=0)      # (B, T_cap, D)

        # cat((features.unsqueeze(1), embed_captn), dim=1) -> (B, T, D)
        seq = jnp.concatenate([features[:, None, :], embed_captn], axis=1)
        T = T_cap + 1

        # Time-major, batch padded to a sublane multiple, flattened to 2-D.
        x_tm = jnp.transpose(seq, (1, 0, 2))                       # (T, B, D)
        Bp = _round_up(max(B, 1), 8)
        if Bp != B:
            x_tm = jnp.pad(x_tm, ((0, 0), (0, Bp - B), (0, 0)))    # (T, Bp, D)
        x_2d = x_tm.reshape(T * Bp, D)

        # Fused multi-layer LSTM. Padding positions (both batch pads and time
        # pads) are harmless: valid outputs only depend on inputs 0..t of
        # their own sequence, and padding sits at the tail of every sequence
        # (lengths sorted descending, enforce_sorted=True).
        h_2d = lstm_stack(x_2d, self.lstm_params, H, T, Bp)        # (T*Bp, H)

        # pack_padded_sequence order: for t in 0..T-1, batch rows with len > t
        # (lengths sorted descending -> contiguous prefix each step).
        leng = [int(l) for l in leng]
        assert all(leng[i] >= leng[i + 1] for i in range(len(leng) - 1)), \
            "pack_padded_sequence(enforce_sorted=True) requires sorted lengths"
        assert max(leng) <= T
        flat_idx = []
        for t in range(T):
            for b_ in range(B):
                if leng[b_] > t:
                    flat_idx.append(t * Bp + b_)
        flat_idx = jnp.asarray(flat_idx, jnp.int32)

        packed_h = jnp.take(h_2d, flat_idx, axis=0)                # (N, H)

        # Linear projection to vocab (tiled Pallas matmul).
        outputs = linear(packed_h, self.lin_w_t, self.lin_b)       # (N, V)
        return outputs


if __name__ == "__main__":
    args = {
        "word_dime": 32,
        "hidd_dime": 32,
        "hidd_layer": 2,
        "vocab_size": 128,
        "max_seq_leng": 20,
    }

    key = jax.random.PRNGKey(0)
    k_model, k_feat, k_cap = jax.random.split(key, 3)

    model = DecoderRNNPallas(args, k_model)

    B, T_cap = 2, 7
    features = jax.random.normal(k_feat, (B, args["word_dime"]), jnp.float32)
    caption = jax.random.randint(k_cap, (B, T_cap), 0, args["vocab_size"],
                                 dtype=jnp.int32)
    leng = [8, 6]  # includes the prepended feature step; sorted descending

    out = model.forward(features, caption, leng)
    out = jax.block_until_ready(out)
    assert out.shape == (sum(leng), args["vocab_size"]), out.shape
    assert bool(jnp.all(jnp.isfinite(out)))
    print("KERNEL_OK")
</pallas_src>

<mosaic_0001>
module attributes {stable_mosaic.version = 11 : i64} {
  func.func @_lstm_stack_kernel(%arg0: memref<64x32xf32, #tpu.memory_space<vmem>>, %arg1: memref<32x128xbf16, #tpu.memory_space<vmem>>, %arg2: memref<32x128xbf16, #tpu.memory_space<vmem>>, %arg3: memref<1x128xf32, #tpu.memory_space<vmem>>, %arg4: memref<32x128xbf16, #tpu.memory_space<vmem>>, %arg5: memref<32x128xbf16, #tpu.memory_space<vmem>>, %arg6: memref<1x128xf32, #tpu.memory_space<vmem>>, %arg7: memref<64x32xf32, #tpu.memory_space<vmem>>, %arg8: memref<8x32xf32, #tpu.memory_space<vmem>>, %arg9: memref<8x32xf32, #tpu.memory_space<vmem>>, %arg10: memref<64x128xf32, #tpu.memory_space<vmem>>) attributes {dimension_semantics = [], scalar_prefetch = 0 : i64, scratch_operands = 3 : i64, tpu.core_type = #tpu.core_type<tc>} {
    %c0 = arith.constant 0 : index
    %c0_0 = arith.constant 0 : index
    %0 = vector.load %arg1[%c0, %c0_0] : memref<32x128xbf16, #tpu.memory_space<vmem>>, vector<32x128xbf16>
    %c0_1 = arith.constant 0 : index
    %c0_2 = arith.constant 0 : index
    %1 = vector.load %arg2[%c0_1, %c0_2] : memref<32x128xbf16, #tpu.memory_space<vmem>>, vector<32x128xbf16>
    %c0_3 = arith.constant 0 : index
    %c0_4 = arith.constant 0 : index
    %2 = vector.load %arg3[%c0_3, %c0_4] : memref<1x128xf32, #tpu.memory_space<vmem>>, vector<1x128xf32>
    %c0_5 = arith.constant 0 : index
    %c0_6 = arith.constant 0 : index
    %3 = vector.load %arg0[%c0_5, %c0_6] : memref<64x32xf32, #tpu.memory_space<vmem>>, vector<64x32xf32>
    %4 = arith.truncf %3 : vector<64x32xf32> to vector<64x32xbf16>
    %cst = arith.constant dense<0.000000e+00> : vector<64x128xf32>
    %5 = tpu.matmul %4, %0, %cst {dimension_numbers = #tpu.dot_dimension_numbers<[1], [0], [0], [1], [0, 0, 1, 1], [], []>} : vector<64x32xbf16>, vector<32x128xbf16>, vector<64x128xf32> -> vector<64x128xf32>
    %6 = vector.broadcast %2 : vector<1x128xf32> to vector<64x128xf32>
    %7 = arith.addf %5, %6 : vector<64x128xf32>
    %c0_7 = arith.constant 0 : index
    %c0_8 = arith.constant 0 : index
    %8 = vector.load %arg10[%c0_7, %c0_8] : memref<64x128xf32, #tpu.memory_space<vmem>>, vector<64x128xf32>
    tpu.vector_store %arg10[%c0_7, %c0_8], %7 {strides = array<i32>} : memref<64x128xf32, #tpu.memory_space<vmem>>, vector<64x128xf32>,
    %cst_9 = arith.constant 0.000000e+00 : f32
    %9 = vector.broadcast %cst_9 : f32 to vector<8x32xf32>
    %c0_10 = arith.constant 0 : index
    %c0_11 = arith.constant 0 : index
    %10 = vector.load %arg8[%c0_10, %c0_11] : memref<8x32xf32, #tpu.memory_space<vmem>>, vector<8x32xf32>
    tpu.vector_store %arg8[%c0_10, %c0_11], %9 {strides = array<i32>} : memref<8x32xf32, #tpu.memory_space<vmem>>, vector<8x32xf32>,
    %cst_12 = arith.constant 0.000000e+00 : f32
    %11 = vector.broadcast %cst_12 : f32 to vector<8x32xf32>
    %c0_13 = arith.constant 0 : index
    %c0_14 = arith.constant 0 : index
    %12 = vector.load %arg9[%c0_13, %c0_14] : memref<8x32xf32, #tpu.memory_space<vmem>>, vector<8x32xf32>
    tpu.vector_store %arg9[%c0_13, %c0_14], %11 {strides = array<i32>} : memref<8x32xf32, #tpu.memory_space<vmem>>, vector<8x32xf32>,
    %c0_i32 = arith.constant 0 : i32
    %c8_i32 = arith.constant 8 : i32
    %13 = arith.addi %c0_i32, %c8_i32 : i32
    %c1_i32 = arith.constant 1 : i32
    scf.for %arg11 = %c0_i32 to %13 step %c1_i32  : i32 {
      %c8_i32_37 = arith.constant 8 : i32
      %28 = arith.muli %arg11, %c8_i32_37 : i32
      %29 = tpu.assume_multiple %28, 8 : i32
      %c0_38 = arith.constant 0 : index
      %c0_39 = arith.constant 0 : index
      %30 = vector.load %arg8[%c0_38, %c0_39] : memref<8x32xf32, #tpu.memory_space<vmem>>, vector<8x32xf32>
      %c0_40 = arith.constant 0 : index
      %c0_41 = arith.constant 0 : index
      %31 = vector.load %arg9[%c0_40, %c0_41] : memref<8x32xf32, #tpu.memory_space<vmem>>, vector<8x32xf32>
      %32 = arith.index_cast %29 : i32 to index
      %c0_42 = arith.constant 0 : index
      %33 = vector.load %arg10[%32, %c0_42] : memref<64x128xf32, #tpu.memory_space<vmem>>, vector<8x128xf32>
      %34 = arith.truncf %30 : vector<8x32xf32> to vector<8x32xbf16>
      %cst_43 = arith.constant dense<0.000000e+00> : vector<8x128xf32>
      %35 = tpu.matmul %34, %1, %cst_43 {dimension_numbers = #tpu.dot_dimension_numbers<[1], [0], [0], [1], [0, 0, 1, 1], [], []>} : vector<8x32xbf16>, vector<32x128xbf16>, vector<8x128xf32> -> vector<8x128xf32>
      %36 = arith.addf %33, %35 : vector<8x128xf32>
      %37 = vector.extract_strided_slice %36 {offsets = [0, 0], sizes = [8, 32], strides = [1, 1]} : vector<8x128xf32> to vector<8x32xf32>
      %38 = arith.negf %37 : vector<8x32xf32>
      %39 = math.exp %38 : vector<8x32xf32>
      %cst_44 = arith.constant 1.000000e+00 : f32
      %40 = vector.broadcast %cst_44 : f32 to vector<8x32xf32>
      %41 = arith.addf %40, %39 : vector<8x32xf32>
      %42 = arith.divf %40, %41 : vector<8x32xf32>
      %43 = vector.extract_strided_slice %36 {offsets = [0, 32], sizes = [8, 32], strides = [1, 1]} : vector<8x128xf32> to vector<8x32xf32>
      %44 = arith.negf %43 : vector<8x32xf32>
      %45 = math.exp %44 : vector<8x32xf32>
      %cst_45 = arith.constant 1.000000e+00 : f32
      %46 = vector.broadcast %cst_45 : f32 to vector<8x32xf32>
      %47 = arith.addf %46, %45 : vector<8x32xf32>
      %48 = arith.divf %46, %47 : vector<8x32xf32>
      %49 = vector.extract_strided_slice %36 {offsets = [0, 64], sizes = [8, 32], strides = [1, 1]} : vector<8x128xf32> to vector<8x32xf32>
      %50 = math.tanh %49 : vector<8x32xf32>
      %51 = vector.extract_strided_slice %36 {offsets = [0, 96], sizes = [8, 32], strides = [1, 1]} : vector<8x128xf32> to vector<8x32xf32>
      %52 = arith.negf %51 : vector<8x32xf32>
      %53 = math.exp %52 : vector<8x32xf32>
      %cst_46 = arith.constant 1.000000e+00 : f32
      %54 = vector.broadcast %cst_46 : f32 to vector<8x32xf32>
      %55 = arith.addf %54, %53 : vector<8x32xf32>
      %56 = arith.divf %54, %55 : vector<8x32xf32>
      %57 = arith.mulf %48, %31 : vector<8x32xf32>
      %58 = arith.mulf %42, %50 : vector<8x32xf32>
      %59 = arith.addf %57, %58 : vector<8x32xf32>
      %60 = math.tanh %59 : vector<8x32xf32>
      %61 = arith.mulf %56, %60 : vector<8x32xf32>
      %c0_47 = arith.constant 0 : index
      %c0_48 = arith.constant 0 : index
      %62 = vector.load %arg9[%c0_47, %c0_48] : memref<8x32xf32, #tpu.memory_space<vmem>>, vector<8x32xf32>
      tpu.vector_store %arg9[%c0_47, %c0_48], %59 {strides = array<i32>} : memref<8x32xf32, #tpu.memory_space<vmem>>, vector<8x32xf32>,
      %c0_49 = arith.constant 0 : index
      %c0_50 = arith.constant 0 : index
      %63 = vector.load %arg8[%c0_49, %c0_50] : memref<8x32xf32, #tpu.memory_space<vmem>>, vector<8x32xf32>
      tpu.vector_store %arg8[%c0_49, %c0_50], %61 {strides = array<i32>} : memref<8x32xf32, #tpu.memory_space<vmem>>, vector<8x32xf32>,
      %64 = arith.index_cast %29 : i32 to index
      %c0_51 = arith.constant 0 : index
      %65 = vector.load %arg7[%64, %c0_51] : memref<64x32xf32, #tpu.memory_space<vmem>>, vector<8x32xf32>
      tpu.vector_store %arg7[%64, %c0_51], %61 {strides = array<i32>} : memref<64x32xf32, #tpu.memory_space<vmem>>, vector<8x32xf32>,
    }
    %c8_i32_15 = arith.constant 8 : i32
    %c0_16 = arith.constant 0 : index
    %c0_17 = arith.constant 0 : index
    %14 = vector.load %arg4[%c0_16, %c0_17] : memref<32x128xbf16, #tpu.memory_space<vmem>>, vector<32x128xbf16>
    %c0_18 = arith.constant 0 : index
    %c0_19 = arith.constant 0 : index
    %15 = vector.load %arg5[%c0_18, %c0_19] : memref<32x128xbf16, #tpu.memory_space<vmem>>, vector<32x128xbf16>
    %c0_20 = arith.constant 0 : index
    %c0_21 = arith.constant 0 : index
    %16 = vector.load %arg6[%c0_20, %c0_21] : memref<1x128xf32, #tpu.memory_space<vmem>>, vector<1x128xf32>
    %c0_22 = arith.constant 0 : index
    %c0_23 = arith.constant 0 : index
    %17 = vector.load %arg7[%c0_22, %c0_23] : memref<64x32xf32, #tpu.memory_space<vmem>>, vector<64x32xf32>
    %18 = arith.truncf %17 : vector<64x32xf32> to vector<64x32xbf16>
    %cst_24 = arith.constant dense<0.000000e+00> : vector<64x128xf32>
    %19 = tpu.matmul %18, %14, %cst_24 {dimension_numbers = #tpu.dot_dimension_numbers<[1], [0], [0], [1], [0, 0, 1, 1], [], []>} : vector<64x32xbf16>, vector<32x128xbf16>, vector<64x128xf32> -> vector<64x128xf32>
    %20 = vector.broadcast %16 : vector<1x128xf32> to vector<64x128xf32>
    %21 = arith.addf %19, %20 : vector<64x128xf32>
    %c0_25 = arith.constant 0 : index
    %c0_26 = arith.constant 0 : index
    %22 = vector.load %arg10[%c0_25, %c0_26] : memref<64x128xf32, #tpu.memory_space<vmem>>, vector<64x128xf32>
    tpu.vector_store %arg10[%c0_25, %c0_26], %21 {strides = array<i32>} : memref<64x128xf32, #tpu.memory_space<vmem>>, vector<64x128xf32>,
    %cst_27 = arith.constant 0.000000e+00 : f32
    %23 = vector.broadcast %cst_27 : f32 to vector<8x32xf32>
    %c0_28 = arith.constant 0 : index
    %c0_29 = arith.constant 0 : index
    %24 = vector.load %arg8[%c0_28, %c0_29] : memref<8x32xf32, #tpu.memory_space<vmem>>, vector<8x32xf32>
    tpu.vector_store %arg8[%c0_28, %c0_29], %23 {strides = array<i32>} : memref<8x32xf32, #tpu.memory_space<vmem>>, vector<8x32xf32>,
    %cst_30 = arith.constant 0.000000e+00 : f32
    %25 = vector.broadcast %cst_30 : f32 to vector<8x32xf32>
    %c0_31 = arith.constant 0 : index
    %c0_32 = arith.constant 0 : index
    %26 = vector.load %arg9[%c0_31, %c0_32] : memref<8x32xf32, #tpu.memory_space<vmem>>, vector<8x32xf32>
    tpu.vector_store %arg9[%c0_31, %c0_32], %25 {strides = array<i32>} : memref<8x32xf32, #tpu.memory_space<vmem>>, vector<8x32xf32>,
    %c0_i32_33 = arith.constant 0 : i32
    %c8_i32_34 = arith.constant 8 : i32
    %27 = arith.addi %c0_i32_33, %c8_i32_34 : i32
    %c1_i32_35 = arith.constant 1 : i32
    scf.for %arg11 = %c0_i32_33 to %27 step %c1_i32_35  : i32 {
      %c8_i32_37 = arith.constant 8 : i32
      %28 = arith.muli %arg11, %c8_i32_37 : i32
      %29 = tpu.assume_multiple %28, 8 : i32
      %c0_38 = arith.constant 0 : index
      %c0_39 = arith.constant 0 : index
      %30 = vector.load %arg8[%c0_38, %c0_39] : memref<8x32xf32, #tpu.memory_space<vmem>>, vector<8x32xf32>
      %c0_40 = arith.constant 0 : index
      %c0_41 = arith.constant 0 : index
      %31 = vector.load %arg9[%c0_40, %c0_41] : memref<8x32xf32, #tpu.memory_space<vmem>>, vector<8x32xf32>
      %32 = arith.index_cast %29 : i32 to index
      %c0_42 = arith.constant 0 : index
      %33 = vector.load %arg10[%32, %c0_42] : memref<64x128xf32, #tpu.memory_space<vmem>>, vector<8x128xf32>
      %34 = arith.truncf %30 : vector<8x32xf32> to vector<8x32xbf16>
      %cst_43 = arith.constant dense<0.000000e+00> : vector<8x128xf32>
      %35 = tpu.matmul %34, %15, %cst_43 {dimension_numbers = #tpu.dot_dimension_numbers<[1], [0], [0], [1], [0, 0, 1, 1], [], []>} : vector<8x32xbf16>, vector<32x128xbf16>, vector<8x128xf32> -> vector<8x128xf32>
      %36 = arith.addf %33, %35 : vector<8x128xf32>
      %37 = vector.extract_strided_slice %36 {offsets = [0, 0], sizes = [8, 32], strides = [1, 1]} : vector<8x128xf32> to vector<8x32xf32>
      %38 = arith.negf %37 : vector<8x32xf32>
      %39 = math.exp %38 : vector<8x32xf32>
      %cst_44 = arith.constant 1.000000e+00 : f32
      %40 = vector.broadcast %cst_44 : f32 to vector<8x32xf32>
      %41 = arith.addf %40, %39 : vector<8x32xf32>
      %42 = arith.divf %40, %41 : vector<8x32xf32>
      %43 = vector.extract_strided_slice %36 {offsets = [0, 32], sizes = [8, 32], strides = [1, 1]} : vector<8x128xf32> to vector<8x32xf32>
      %44 = arith.negf %43 : vector<8x32xf32>
      %45 = math.exp %44 : vector<8x32xf32>
      %cst_45 = arith.constant 1.000000e+00 : f32
      %46 = vector.broadcast %cst_45 : f32 to vector<8x32xf32>
      %47 = arith.addf %46, %45 : vector<8x32xf32>
      %48 = arith.divf %46, %47 : vector<8x32xf32>
      %49 = vector.extract_strided_slice %36 {offsets = [0, 64], sizes = [8, 32], strides = [1, 1]} : vector<8x128xf32> to vector<8x32xf32>
      %50 = math.tanh %49 : vector<8x32xf32>
      %51 = vector.extract_strided_slice %36 {offsets = [0, 96], sizes = [8, 32], strides = [1, 1]} : vector<8x128xf32> to vector<8x32xf32>
      %52 = arith.negf %51 : vector<8x32xf32>
      %53 = math.exp %52 : vector<8x32xf32>
      %cst_46 = arith.constant 1.000000e+00 : f32
      %54 = vector.broadcast %cst_46 : f32 to vector<8x32xf32>
      %55 = arith.addf %54, %53 : vector<8x32xf32>
      %56 = arith.divf %54, %55 : vector<8x32xf32>
      %57 = arith.mulf %48, %31 : vector<8x32xf32>
      %58 = arith.mulf %42, %50 : vector<8x32xf32>
      %59 = arith.addf %57, %58 : vector<8x32xf32>
      %60 = math.tanh %59 : vector<8x32xf32>
      %61 = arith.mulf %56, %60 : vector<8x32xf32>
      %c0_47 = arith.constant 0 : index
      %c0_48 = arith.constant 0 : index
      %62 = vector.load %arg9[%c0_47, %c0_48] : memref<8x32xf32, #tpu.memory_space<vmem>>, vector<8x32xf32>
      tpu.vector_store %arg9[%c0_47, %c0_48], %59 {strides = array<i32>} : memref<8x32xf32, #tpu.memory_space<vmem>>, vector<8x32xf32>,
      %c0_49 = arith.constant 0 : index
      %c0_50 = arith.constant 0 : index
      %63 = vector.load %arg8[%c0_49, %c0_50] : memref<8x32xf32, #tpu.memory_space<vmem>>, vector<8x32xf32>
      tpu.vector_store %arg8[%c0_49, %c0_50], %61 {strides = array<i32>} : memref<8x32xf32, #tpu.memory_space<vmem>>, vector<8x32xf32>,
      %64 = arith.index_cast %29 : i32 to index
      %c0_51 = arith.constant 0 : index
      %65 = vector.load %arg7[%64, %c0_51] : memref<64x32xf32, #tpu.memory_space<vmem>>, vector<8x32xf32>
      tpu.vector_store %arg7[%64, %c0_51], %61 {strides = array<i32>} : memref<64x32xf32, #tpu.memory_space<vmem>>, vector<8x32xf32>,
    }
    %c8_i32_36 = arith.constant 8 : i32
    return
  }
}

</mosaic_0001>

<llo_original>
// kernel: tpu_custom_call.1
$region0: #{tpu_custom_call.1}
  #allocation0 [shape = 'u32[]', space=smem, size = 0x4, offset = 0x4, fixed_abs, tag = 'smem constant byte address 0x4 - core index']
  #allocation1 [shape = 'u32[144,128]{1,0:T(1,128)}', space=vmem, size = 0x12000, scoped, tag = 'internal scratch']
  #allocation2 [shape = 'f32[8,32]{1,0:T(8,128)}', space=vmem, size = 0x1000, scoped, tag = 'scratch operand']
  #allocation3 [shape = 'f32[8,32]{1,0:T(8,128)}', space=vmem, size = 0x1000, scoped, tag = 'scratch operand']
  #allocation4 [shape = 'f32[64,128]{1,0:T(8,128)}', space=vmem, size = 0x8000, scoped, tag = 'scratch operand']
  %s0 = inlined_call_operand.vmem [shape: f32[64,32], index: 0, kind: input, shape index: {}]
  %s1 = inlined_call_operand.vmem [shape: bf16[32,128], index: 1, kind: input, shape index: {}]
  %s2 = inlined_call_operand.vmem [shape: bf16[32,128], index: 2, kind: input, shape index: {}]
  %s3 = inlined_call_operand.vmem [shape: f32[1,128], index: 3, kind: input, shape index: {}]
  %s4 = inlined_call_operand.vmem [shape: bf16[32,128], index: 4, kind: input, shape index: {}]
  %s5 = inlined_call_operand.vmem [shape: bf16[32,128], index: 5, kind: input, shape index: {}]
  %s6 = inlined_call_operand.vmem [shape: f32[1,128], index: 6, kind: input, shape index: {}]
  %s7 = inlined_call_operand.vmem [shape: f32[64,32], index: 7, kind: output, shape index: {}]
  %s8 = sld [smem:[#allocation0]]
  $region52: #{tpu_custom_call.1} parent=0
    _
  %s10 = ssub.s32 1, %s8
  %s11 = scalar_select 0, %s10, %s8
  // Predicated region
  $region2: #{tpu_custom_call.1} parent=0 // pred_check
    _
  $region3: #{tpu_custom_call.1} parent=0 // pred_check_branch
    %13 = sbr.rel (0) target = $region5
  $region4: #{tpu_custom_call.1} parent=0 // pred_region
    _
  $region5: #{tpu_custom_call.1} parent=0 // pred_fallthru
    _
  // Predicated region
  $region6: #{tpu_custom_call.1} parent=0 // pred_check
    _
  $region7: #{tpu_custom_call.1} parent=0 // pred_check_branch
    %15 = sbr.rel (0) target = $region9
  $region8: #{tpu_custom_call.1} parent=0 // pred_region
    _
  $region9: #{tpu_custom_call.1} parent=0 // pred_fallthru
    _
  // Predicated region
  $region10: #{tpu_custom_call.1} parent=0 // pred_check
    _
  $region11: #{tpu_custom_call.1} parent=0 // pred_check_branch
    %17 = sbr.rel (0) target = $region13
  $region12: #{tpu_custom_call.1} parent=0 // pred_region
    _
  $region13: #{tpu_custom_call.1} parent=0 // pred_fallthru
    _
  // Predicated region
  $region14: #{tpu_custom_call.1} parent=0 // pred_check
    _
  $region15: #{tpu_custom_call.1} parent=0 // pred_check_branch
    %19 = sbr.rel (0) target = $region17
  $region16: #{tpu_custom_call.1} parent=0 // pred_region
    _
  $region17: #{tpu_custom_call.1} parent=0 // pred_fallthru
    _
  // Predicated region
  $region18: #{tpu_custom_call.1} parent=0 // pred_check
    _
  $region19: #{tpu_custom_call.1} parent=0 // pred_check_branch
    %21 = sbr.rel (0) target = $region21
  $region20: #{tpu_custom_call.1} parent=0 // pred_region
    _
  $region21: #{tpu_custom_call.1} parent=0 // pred_fallthru
    _
  // Predicated region
  $region22: #{tpu_custom_call.1} parent=0 // pred_check
    _
  $region23: #{tpu_custom_call.1} parent=0 // pred_check_branch
    %23 = sbr.rel (0) target = $region25
  $region24: #{tpu_custom_call.1} parent=0 // pred_region
    _
  $region25: #{tpu_custom_call.1} parent=0 // pred_fallthru
    _
  // Predicated region
  $region26: #{tpu_custom_call.1} parent=0 // pred_check
    _
  $region27: #{tpu_custom_call.1} parent=0 // pred_check_branch
    %25 = sbr.rel (0) target = $region29
  $region28: #{tpu_custom_call.1} parent=0 // pred_region
    _
  $region29: #{tpu_custom_call.1} parent=0 // pred_fallthru
    _
  %v27 = vld [vmem:[%s1] sm:$0xf]
  %v28 = vld [vmem:[%s1 + $0x4] sm:$0xf]
  %v29 = vld [vmem:[%s1 + $0x8] sm:$0xf]
  %v30 = vld [vmem:[%s1 + $0xc] sm:$0xf]
  %v31 = vld [vmem:[%s2] sm:$0xf]
  %v32 = vld [vmem:[%s2 + $0x4] sm:$0xf]
  %v33 = vld [vmem:[%s2 + $0x8] sm:$0xf]
  %v34 = vld [vmem:[%s2 + $0xc] sm:$0xf]
  %v35 = vld [vmem:[%s3] sm:$0x1]
  %v36 = vld [vmem:[%s0] sm:$0xff]
  %v37 = vld [vmem:[%s0 + $0x8] sm:$0xff]
  %v38 = vld [vmem:[%s0 + $0x10] sm:$0xff]
  %v39 = vld [vmem:[%s0 + $0x18] sm:$0xff]
  %v40 = vld [vmem:[%s0 + $0x20] sm:$0xff]
  %v41 = vld [vmem:[%s0 + $0x28] sm:$0xff]
  %v42 = vld [vmem:[%s0 + $0x30] sm:$0xff]
  %v43 = vld [vmem:[%s0 + $0x38] sm:$0xff]
  %v44 = vpack.c.bf16 %v37, %v36
  %v45 = vpack.c.bf16 %v39, %v38
  %v46 = vpack.c.bf16 %v41, %v40
  %v47 = vpack.c.bf16 %v43, %v42
  %v49 = vlaneseq
  %v50 = vshrl.u32 %v49, 7
  %v51 = vsub.s32 0, %v50
  %v52 = vrot.slane %v35, %v51
  %v58 = vunpack.c.l.b16 %v27
  %v59 = vunpack.c.l.b16 %v28
  %v60 = vunpack.c.l.b16 %v29
  %v61 = vunpack.c.l.b16 %v30
  %v62 = vpack.c.b16 %v59, %v58
  %v63 = vpack.c.b16 %v61, %v60
  %vm66 = vcmask 261120
  %v68 = vsel %vm66, %v44, 0
  %v71 = vsel %vm66, %v45, 0
  %v74 = vsel %vm66, %v46, 0
  %v77 = vsel %vm66, %v47, 0
  %79 = vmatprep.subr.bf16.mxu0 0
  %80 = vmatpush1.bf16.msra.mxu0 %v62
  %81 = vmatprep.subr.bf16.mxu0 0
  %82 = vmatpush1.bf16.msra.mxu0 %v63
  %83 = vmatprep.subr.bf16.mxu0 0
  %84 = vmatpush1.bf16.msra.mxu0 0
  %85 = vmatprep.subr.bf16.mxu0 0
  %86 = vmatpush1.bf16.msra.mxu0 0
  %87 = vmatprep.subr.bf16.mxu0 0
  %88 = vmatpush1.bf16.msra.mxu0 0
  %89 = vmatprep.subr.bf16.mxu0 0
  %90 = vmatpush1.bf16.msra.mxu0 0
  %91 = vmatprep.subr.bf16.mxu0 0
  %92 = vmatpush1.bf16.msra.mxu0 0
  %93 = vmatprep.subr.bf16.mxu0 0
  %94 = vmatpush1.bf16.msra.mxu0 0
  %95 = vmatprep.subr.bf16.mxu0 0
  %96 = vmatpush1.bf16.msra.mxu0 0
  %97 = vmatprep.subr.bf16.mxu0 0
  %98 = vmatpush1.bf16.msra.mxu0 0
  %99 = vmatprep.subr.bf16.mxu0 0
  %100 = vmatpush1.bf16.msra.mxu0 0
  %101 = vmatprep.subr.bf16.mxu0 0
  %102 = vmatpush1.bf16.msra.mxu0 0
  %103 = vmatprep.subr.bf16.mxu0 0
  %104 = vmatpush1.bf16.msra.mxu0 0
  %105 = vmatprep.subr.bf16.mxu0 0
  %106 = vmatpush1.bf16.msra.mxu0 0
  %107 = vmatprep.subr.bf16.mxu0 0
  %108 = vmatpush1.bf16.msra.mxu0 0
  %109 = vmatprep.subr.bf16.mxu0 0
  %110 = vmatpush1.bf16.msra.mxu0 0
  %111 = vmatprep.mubr.bf16.mxu0 0
  %112 = vmatmul.mubr.bf16.gmra.mrb[0].mxu0 %v68
  %v113 = vpop.f32.mrb[0].mxu0
  %v114 = vadd.f32 %v52, %v113
  %v115 = vpop.f32.mrb[0].mxu0
  %v116 = vpop.f32.mrb[0].mxu0
  %v117 = vadd.f32 %v52, %v116
  %v118 = vpop.f32.mrb[0].mxu0
  %119 = vmatprep.mubr.bf16.mxu0 0
  %120 = vmatmul.mubr.bf16.gmra.mrb[0].mxu0 %v71
  %v121 = vpop.f32.mrb[0].mxu0
  %v122 = vadd.f32 %v52, %v121
  %v123 = vpop.f32.mrb[0].mxu0
  %v124 = vpop.f32.mrb[0].mxu0
  %v125 = vadd.f32 %v52, %v124
  %v126 = vpop.f32.mrb[0].mxu0
  %127 = vmatprep.mubr.bf16.mxu0 0
  %128 = vmatmul.mubr.bf16.gmra.mrb[0].mxu0 %v74
  %v129 = vpop.f32.mrb[0].mxu0
  %v130 = vadd.f32 %v52, %v129
  %v131 = vpop.f32.mrb[0].mxu0
  %v132 = vpop.f32.mrb[0].mxu0
  %v133 = vadd.f32 %v52, %v132
  %v134 = vpop.f32.mrb[0].mxu0
  %135 = vmatprep.mubr.bf16.mxu0 0
  %136 = vmatmul.mubr.bf16.gmra.mrb[0].mxu0 %v77
  %v137 = vpop.f32.mrb[0].mxu0
  %v138 = vadd.f32 %v52, %v137
  %v139 = vpop.f32.mrb[0].mxu0
  %v140 = vpop.f32.mrb[0].mxu0
  %v141 = vadd.f32 %v52, %v140
  %v142 = vpop.f32.mrb[0].mxu0
  %143 = vdwg.mxu0
  %144 = vst [vmem:[#allocation4] sm:$0xff] %v114
  %145 = vst [vmem:[#allocation4 + $0x8] sm:$0xff] %v117
  %146 = vst [vmem:[#allocation4 + $0x10] sm:$0xff] %v122
  %147 = vst [vmem:[#allocation4 + $0x18] sm:$0xff] %v125
  %148 = vst [vmem:[#allocation4 + $0x20] sm:$0xff] %v130
  %149 = vst [vmem:[#allocation4 + $0x28] sm:$0xff] %v133
  %150 = vst [vmem:[#allocation4 + $0x30] sm:$0xff] %v138
  %151 = vst [vmem:[#allocation4 + $0x38] sm:$0xff] %v141
  %152 = vst.msk [vmem:[#allocation2] sm:$0xff] %vm66, 0.0
  %153 = vst.msk [vmem:[#allocation3] sm:$0xff] %vm66, 0.0
  loop: start=0, step=1, limit=8
  $region30: #{tpu_custom_call.1} parent=0 // loop_pre_header
    _
  $region31: #{tpu_custom_call.1} parent=0 // loop_header
    %s155 = sphi 0, %s159
    %p156 = scmp.ge.s32.totalorder %s155, 8
  $region32: #{tpu_custom_call.1} parent=0 // loop_header_branch
    %158 = sbr.rel (%p156) target = $region36
  $region33: #{tpu_custom_call.1} parent=0 // loop_body
    %s160 = smul.u32 %s155, 8
    %v161 = vld [vmem:[#allocation2] sm:$0xff]
    %v162 = vld [vmem:[#allocation3] sm:$0xff]
    %s163 = scalar_lea.vmem [#allocation4], %s160
    %v164 = vld [vmem:[%s163] sm:$0xff]
    %v165 = vpack.c.bf16 %v161, %v161
    %v170 = vunpack.c.l.b16 %v31
    %v171 = vunpack.c.l.b16 %v32
    %v172 = vunpack.c.l.b16 %v33
    %v173 = vunpack.c.l.b16 %v34
    %v174 = vpack.c.b16 %v171, %v170
    %v175 = vpack.c.b16 %v173, %v172
    %v179 = vsel %vm66, %v165, 0
    %181 = vmatprep.subr.bf16.mxu0 0
    %182 = vmatpush1.bf16.msra.mxu0 %v174
    %183 = vmatprep.subr.bf16.mxu0 0
    %184 = vmatpush1.bf16.msra.mxu0 %v175
    %185 = vmatprep.subr.bf16.mxu0 0
    %186 = vmatpush1.bf16.msra.mxu0 0
    %187 = vmatprep.subr.bf16.mxu0 0
    %188 = vmatpush1.bf16.msra.mxu0 0
    %189 = vmatprep.subr.bf16.mxu0 0
    %190 = vmatpush1.bf16.msra.mxu0 0
    %191 = vmatprep.subr.bf16.mxu0 0
    %192 = vmatpush1.bf16.msra.mxu0 0
    %193 = vmatprep.subr.bf16.mxu0 0
    %194 = vmatpush1.bf16.msra.mxu0 0
    %195 = vmatprep.subr.bf16.mxu0 0
    %196 = vmatpush1.bf16.msra.mxu0 0
    %197 = vmatprep.subr.bf16.mxu0 0
    %198 = vmatpush1.bf16.msra.mxu0 0
    %199 = vmatprep.subr.bf16.mxu0 0
    %200 = vmatpush1.bf16.msra.mxu0 0
    %201 = vmatprep.subr.bf16.mxu0 0
    %202 = vmatpush1.bf16.msra.mxu0 0
    %203 = vmatprep.subr.bf16.mxu0 0
    %204 = vmatpush1.bf16.msra.mxu0 0
    %205 = vmatprep.subr.bf16.mxu0 0
    %206 = vmatpush1.bf16.msra.mxu0 0
    %207 = vmatprep.subr.bf16.mxu0 0
    %208 = vmatpush1.bf16.msra.mxu0 0
    %209 = vmatprep.subr.bf16.mxu0 0
    %210 = vmatpush1.bf16.msra.mxu0 0
    %211 = vmatprep.subr.bf16.mxu0 0
    %212 = vmatpush1.bf16.msra.mxu0 0
    %213 = vmatprep.mubr.bf16.mxu0 0
    %214 = vmatmul.mubr.bf16.gmra.mrb[0].mxu0 %v179
    %v215 = vpop.f32.mrb[0].mxu0
    %v216 = vadd.f32 0.0, %v215
    %v217 = vpop.f32.mrb[0].mxu0
    %v218 = vpop.f32.mrb[0].mxu0
    %v219 = vpop.f32.mrb[0].mxu0
    %220 = vdwg.mxu0
    %v221 = vadd.f32 %v164, %v216
    %v222 = vxor.u32 %v221, 2147483648
    %v223 = vmul.f32 %v222, 1.442695
    %v224 = vpow.pop %v223
    %v225 = vadd.f32 %v224, 1.0
    %v226 = vrcp.pop %v225
    %v227 = vmul.f32 1.0, %v226
    %v228 = vtanh.pop %v221
    %230 = vrot.lane.b32.xlu0 %v162, 32
    %v231 = vpop.permute.xlu0 %230
    %v233 = vmul.f32 %v227, %v231
    %235 = vrot.lane.b32.xlu0 %v228, 64
    %v236 = vpop.permute.xlu0 %235
    %v238 = vmul.f32 %v227, %v236
    %240 = vrot.lane.b32.xlu0 %v238, 32
    %v241 = vpop.permute.xlu0 %240
    %v243 = vadd.f32 %v233, %v241
    %v244 = vtanh.pop %v243
    %246 = vrot.lane.b32.xlu0 %v244, 64
    %v247 = vpop.permute.xlu0 %246
    %v249 = vmul.f32 %v227, %v247
    %251 = vrot.lane.b32.xlu0 %v243, 96
    %v252 = vpop.permute.xlu0 %251
    %254 = vst.msk [vmem:[#allocation3] sm:$0xff] %vm66, %v252
    %256 = vrot.lane.b32.xlu0 %v249, 32
    %v257 = vpop.permute.xlu0 %256
    %259 = vst.msk [vmem:[#allocation2] sm:$0xff] %vm66, %v257
    %s260 = scalar_lea.vmem %s7, %s160
    %261 = vst.msk [vmem:[%s260] sm:$0xff] %vm66, %v257
  $region34: #{tpu_custom_call.1} parent=0 // loop_footer
    %s159 = sadd.s32 1, %s155
  $region35: #{tpu_custom_call.1} parent=0 // loop_footer_branch
    %154 = sbr.rel target = $region31
  $region36: #{tpu_custom_call.1} parent=0 // loop_exit
    _
  %v262 = vld [vmem:[%s4] sm:$0xf]
  %v263 = vld [vmem:[%s4 + $0x4] sm:$0xf]
  %v264 = vld [vmem:[%s4 + $0x8] sm:$0xf]
  %v265 = vld [vmem:[%s4 + $0xc] sm:$0xf]
  %v266 = vld [vmem:[%s5] sm:$0xf]
  %v267 = vld [vmem:[%s5 + $0x4] sm:$0xf]
  %v268 = vld [vmem:[%s5 + $0x8] sm:$0xf]
  %v269 = vld [vmem:[%s5 + $0xc] sm:$0xf]
  %v270 = vld [vmem:[%s6] sm:$0x1]
  %v271 = vld [vmem:[%s7] sm:$0xff]
  %v272 = vld [vmem:[%s7 + $0x8] sm:$0xff]
  %v273 = vld [vmem:[%s7 + $0x10] sm:$0xff]
  %v274 = vld [vmem:[%s7 + $0x18] sm:$0xff]
  %v275 = vld [vmem:[%s7 + $0x20] sm:$0xff]
  %v276 = vld [vmem:[%s7 + $0x28] sm:$0xff]
  %v277 = vld [vmem:[%s7 + $0x30] sm:$0xff]
  %v278 = vld [vmem:[%s7 + $0x38] sm:$0xff]
  %v279 = vpack.c.bf16 %v272, %v271
  %v280 = vpack.c.bf16 %v274, %v273
  %v281 = vpack.c.bf16 %v276, %v275
  %v282 = vpack.c.bf16 %v278, %v277
  %v284 = vlaneseq
  %v285 = vshrl.u32 %v284, 7
  %v286 = vsub.s32 0, %v285
  %v287 = vrot.slane %v270, %v286
  %v293 = vunpack.c.l.b16 %v262
  %v294 = vunpack.c.l.b16 %v263
  %v295 = vunpack.c.l.b16 %v264
  %v296 = vunpack.c.l.b16 %v265
  %v297 = vpack.c.b16 %v294, %v293
  %v298 = vpack.c.b16 %v296, %v295
  %v302 = vsel %vm66, %v279, 0
  %v305 = vsel %vm66, %v280, 0
  %v308 = vsel %vm66, %v281, 0
  %v311 = vsel %vm66, %v282, 0
  %313 = vmatprep.subr.bf16.mxu0 0
  %314 = vmatpush1.bf16.msra.mxu0 %v297
  %315 = vmatprep.subr.bf16.mxu0 0
  %316 = vmatpush1.bf16.msra.mxu0 %v298
  %317 = vmatprep.subr.bf16.mxu0 0
  %318 = vmatpush1.bf16.msra.mxu0 0
  %319 = vmatprep.subr.bf16.mxu0 0
  %320 = vmatpush1.bf16.msra.mxu0 0
  %321 = vmatprep.subr.bf16.mxu0 0
  %322 = vmatpush1.bf16.msra.mxu0 0
  %323 = vmatprep.subr.bf16.mxu0 0
  %324 = vmatpush1.bf16.msra.mxu0 0
  %325 = vmatprep.subr.bf16.mxu0 0
  %326 = vmatpush1.bf16.msra.mxu0 0
  %327 = vmatprep.subr.bf16.mxu0 0
  %328 = vmatpush1.bf16.msra.mxu0 0
  %329 = vmatprep.subr.bf16.mxu0 0
  %330 = vmatpush1.bf16.msra.mxu0 0
  %331 = vmatprep.subr.bf16.mxu0 0
  %332 = vmatpush1.bf16.msra.mxu0 0
  %333 = vmatprep.subr.bf16.mxu0 0
  %334 = vmatpush1.bf16.msra.mxu0 0
  %335 = vmatprep.subr.bf16.mxu0 0
  %336 = vmatpush1.bf16.msra.mxu0 0
  %337 = vmatprep.subr.bf16.mxu0 0
  %338 = vmatpush1.bf16.msra.mxu0 0
  %339 = vmatprep.subr.bf16.mxu0 0
  %340 = vmatpush1.bf16.msra.mxu0 0
  %341 = vmatprep.subr.bf16.mxu0 0
  %342 = vmatpush1.bf16.msra.mxu0 0
  %343 = vmatprep.subr.bf16.mxu0 0
  %344 = vmatpush1.bf16.msra.mxu0 0
  %345 = vmatprep.mubr.bf16.mxu0 0
  %346 = vmatmul.mubr.bf16.gmra.mrb[0].mxu0 %v302
  %v347 = vpop.f32.mrb[0].mxu0
  %v348 = vadd.f32 %v287, %v347
  %v349 = vpop.f32.mrb[0].mxu0
  %v350 = vpop.f32.mrb[0].mxu0
  %v351 = vadd.f32 %v287, %v350
  %v352 = vpop.f32.mrb[0].mxu0
  %353 = vmatprep.mubr.bf16.mxu0 0
  %354 = vmatmul.mubr.bf16.gmra.mrb[0].mxu0 %v305
  %v355 = vpop.f32.mrb[0].mxu0
  %v356 = vadd.f32 %v287, %v355
  %v357 = vpop.f32.mrb[0].mxu0
  %v358 = vpop.f32.mrb[0].mxu0
  %v359 = vadd.f32 %v287, %v358
  %v360 = vpop.f32.mrb[0].mxu0
  %361 = vmatprep.mubr.bf16.mxu0 0
  %362 = vmatmul.mubr.bf16.gmra.mrb[0].mxu0 %v308
  %v363 = vpop.f32.mrb[0].mxu0
  %v364 = vadd.f32 %v287, %v363
  %v365 = vpop.f32.mrb[0].mxu0
  %v366 = vpop.f32.mrb[0].mxu0
  %v367 = vadd.f32 %v287, %v366
  %v368 = vpop.f32.mrb[0].mxu0
  %369 = vmatprep.mubr.bf16.mxu0 0
  %370 = vmatmul.mubr.bf16.gmra.mrb[0].mxu0 %v311
  %v371 = vpop.f32.mrb[0].mxu0
  %v372 = vadd.f32 %v287, %v371
  %v373 = vpop.f32.mrb[0].mxu0
  %v374 = vpop.f32.mrb[0].mxu0
  %v375 = vadd.f32 %v287, %v374
  %v376 = vpop.f32.mrb[0].mxu0
  %377 = vdwg.mxu0
  %378 = vst [vmem:[#allocation4] sm:$0xff] %v348
  %379 = vst [vmem:[#allocation4 + $0x8] sm:$0xff] %v351
  %380 = vst [vmem:[#allocation4 + $0x10] sm:$0xff] %v356
  %381 = vst [vmem:[#allocation4 + $0x18] sm:$0xff] %v359
  %382 = vst [vmem:[#allocation4 + $0x20] sm:$0xff] %v364
  %383 = vst [vmem:[#allocation4 + $0x28] sm:$0xff] %v367
  %384 = vst [vmem:[#allocation4 + $0x30] sm:$0xff] %v372
  %385 = vst [vmem:[#allocation4 + $0x38] sm:$0xff] %v375
  %386 = vst.msk [vmem:[#allocation2] sm:$0xff] %vm66, 0.0
  %387 = vst.msk [vmem:[#allocation3] sm:$0xff] %vm66, 0.0
  loop: start=0, step=1, limit=8
  $region37: #{tpu_custom_call.1} parent=0 // loop_pre_header
    _
  $region38: #{tpu_custom_call.1} parent=0 // loop_header
    %s389 = sphi 0, %s393
    %p390 = scmp.ge.s32.totalorder %s389, 8
  $region39: #{tpu_custom_call.1} parent=0 // loop_header_branch
    %392 = sbr.rel (%p390) target = $region43
  $region40: #{tpu_custom_call.1} parent=0 // loop_body
    %s394 = smul.u32 %s389, 8
    %v395 = vld [vmem:[#allocation2] sm:$0xff]
    %v396 = vld [vmem:[#allocation3] sm:$0xff]
    %s397 = scalar_lea.vmem [#allocation4], %s394
    %v398 = vld [vmem:[%s397] sm:$0xff]
    %v399 = vpack.c.bf16 %v395, %v395
    %v404 = vunpack.c.l.b16 %v266
    %v405 = vunpack.c.l.b16 %v267
    %v406 = vunpack.c.l.b16 %v268
    %v407 = vunpack.c.l.b16 %v269
    %v408 = vpack.c.b16 %v405, %v404
    %v409 = vpack.c.b16 %v407, %v406
    %v413 = vsel %vm66, %v399, 0
    %415 = vmatprep.subr.bf16.mxu0 0
    %416 = vmatpush1.bf16.msra.mxu0 %v408
    %417 = vmatprep.subr.bf16.mxu0 0
    %418 = vmatpush1.bf16.msra.mxu0 %v409
    %419 = vmatprep.subr.bf16.mxu0 0
    %420 = vmatpush1.bf16.msra.mxu0 0
    %421 = vmatprep.subr.bf16.mxu0 0
    %422 = vmatpush1.bf16.msra.mxu0 0
    %423 = vmatprep.subr.bf16.mxu0 0
    %424 = vmatpush1.bf16.msra.mxu0 0
    %425 = vmatprep.subr.bf16.mxu0 0
    %426 = vmatpush1.bf16.msra.mxu0 0
    %427 = vmatprep.subr.bf16.mxu0 0
    %428 = vmatpush1.bf16.msra.mxu0 0
    %429 = vmatprep.subr.bf16.mxu0 0
    %430 = vmatpush1.bf16.msra.mxu0 0
    %431 = vmatprep.subr.bf16.mxu0 0
    %432 = vmatpush1.bf16.msra.mxu0 0
    %433 = vmatprep.subr.bf16.mxu0 0
    %434 = vmatpush1.bf16.msra.mxu0 0
    %435 = vmatprep.subr.bf16.mxu0 0
    %436 = vmatpush1.bf16.msra.mxu0 0
    %437 = vmatprep.subr.bf16.mxu0 0
    %438 = vmatpush1.bf16.msra.mxu0 0
    %439 = vmatprep.subr.bf16.mxu0 0
    %440 = vmatpush1.bf16.msra.mxu0 0
    %441 = vmatprep.subr.bf16.mxu0 0
    %442 = vmatpush1.bf16.msra.mxu0 0
    %443 = vmatprep.subr.bf16.mxu0 0
    %444 = vmatpush1.bf16.msra.mxu0 0
    %445 = vmatprep.subr.bf16.mxu0 0
    %446 = vmatpush1.bf16.msra.mxu0 0
    %447 = vmatprep.mubr.bf16.mxu0 0
    %448 = vmatmul.mubr.bf16.gmra.mrb[0].mxu0 %v413
    %v449 = vpop.f32.mrb[0].mxu0
    %v450 = vadd.f32 0.0, %v449
    %v451 = vpop.f32.mrb[0].mxu0
    %v452 = vpop.f32.mrb[0].mxu0
    %v453 = vpop.f32.mrb[0].mxu0
    %454 = vdwg.mxu0
    %v455 = vadd.f32 %v398, %v450
    %v456 = vxor.u32 %v455, 2147483648
    %v457 = vmul.f32 %v456, 1.442695
    %v458 = vpow.pop %v457
    %v459 = vadd.f32 %v458, 1.0
    %v460 = vrcp.pop %v459
    %v461 = vmul.f32 1.0, %v460
    %v462 = vtanh.pop %v455
    %464 = vrot.lane.b32.xlu0 %v396, 32
    %v465 = vpop.permute.xlu0 %464
    %v467 = vmul.f32 %v461, %v465
    %469 = vrot.lane.b32.xlu0 %v462, 64
    %v470 = vpop.permute.xlu0 %469
    %v472 = vmul.f32 %v461, %v470
    %474 = vrot.lane.b32.xlu0 %v472, 32
    %v475 = vpop.permute.xlu0 %474
    %v477 = vadd.f32 %v467, %v475
    %v478 = vtanh.pop %v477
    %480 = vrot.lane.b32.xlu0 %v478, 64
    %v481 = vpop.permute.xlu0 %480
    %v483 = vmul.f32 %v461, %v481
    %485 = vrot.lane.b32.xlu0 %v477, 96
    %v486 = vpop.permute.xlu0 %485
    %488 = vst.msk [vmem:[#allocation3] sm:$0xff] %vm66, %v486
    %490 = vrot.lane.b32.xlu0 %v483, 32
    %v491 = vpop.permute.xlu0 %490
    %493 = vst.msk [vmem:[#allocation2] sm:$0xff] %vm66, %v491
    %s494 = scalar_lea.vmem %s7, %s394
    %495 = vst.msk [vmem:[%s494] sm:$0xff] %vm66, %v491
  $region41: #{tpu_custom_call.1} parent=0 // loop_footer
    %s393 = sadd.s32 1, %s389
  $region42: #{tpu_custom_call.1} parent=0 // loop_footer_branch
    %388 = sbr.rel target = $region38
  $region43: #{tpu_custom_call.1} parent=0 // loop_exit
    _
  // Predicated region
  $region44: #{tpu_custom_call.1} parent=0 // pred_check
    _
  $region45: #{tpu_custom_call.1} parent=0 // pred_check_branch
    %497 = sbr.rel (0) target = $region47
  $region46: #{tpu_custom_call.1} parent=0 // pred_region
    _
  $region47: #{tpu_custom_call.1} parent=0 // pred_fallthru
    _
  // Predicated region
  $region48: #{tpu_custom_call.1} parent=0 // pred_check
    _
  $region49: #{tpu_custom_call.1} parent=0 // pred_check_branch
    %499 = sbr.rel (0) target = $region51
  $region50: #{tpu_custom_call.1} parent=0 // pred_region
    _
  $region51: #{tpu_custom_call.1} parent=0 // pred_fallthru
    _

</llo_original>
